<compile_context>
chip_gen: v5e
topology: v5e:2x2
jax: 0.10.0
libtpu: 0.0.40
codegen_flags: <defaults>
</compile_context>

<pallas_src>
import functools
import math

import jax
import jax.numpy as jnp
from jax import lax
from jax.experimental import pallas as pl
from jax.experimental.pallas import tpu as pltpu

LANE = 128
SUBLANE = 8
_CHUNK_ROWS = 512        # in-kernel row chunk: bounds f32 temporaries to ~256 KiB
_ACC_ROWS_MAX = 64       # widened accumulator: 8 independent add chains
_LN2 = float(math.log(2.0))


def _round_up(v, m):
    return ((v + m - 1) // m) * m


def _logcosh_kernel(x_ref, t_ref, o_ref, acc_ref, *,
                    rows, block_rows, chunk_rows, acc_rows,
                    steps, total_blocks, has_ragged, has_pad_steps):
    s = pl.program_id(0)          # segment axis ("parallel"; megacore on v7x)
    i = pl.program_id(1)          # streaming/reduction axis ("arbitrary")
    blk = s * steps + i           # logical block index (before index_map clamp)

    @pl.when(i == 0)
    def _init():
        acc_ref[...] = jnp.zeros_like(acc_ref)

    n_chunks = block_rows // chunk_rows

    def accumulate(xc, tc, row_base, masked):
        xf = xc.astype(jnp.float32)
        tf = tc.astype(jnp.float32)
        diff = jnp.maximum(xf - tf, -20.0)          # lower clamp only (spec)
        if masked:
            # Row-level mask: wrapper guarantees lane alignment, so only rows
            # past the true row count (ragged last block padding) are zeroed.
            rid = lax.broadcasted_iota(jnp.int32, diff.shape, 0)
            diff = jnp.where(row_base + rid < rows, diff, 0.0)
        term = diff * (jnp.log(1.0 + jnp.exp(-2.0 * diff)) - _LN2)
        acc_ref[...] += term.reshape(-1, acc_rows, LANE).sum(axis=0)

    def body(masked):
        if n_chunks == 1:
            accumulate(x_ref[...], t_ref[...], blk * block_rows, masked)
        else:
            def chunk_body(c, carry):
                r0 = pl.multiple_of(c * chunk_rows, chunk_rows)
                accumulate(x_ref[pl.ds(r0, chunk_rows), :],
                           t_ref[pl.ds(r0, chunk_rows), :],
                           blk * block_rows + r0, masked)
                return carry
            lax.fori_loop(0, n_chunks, chunk_body, jnp.int32(0))

    if (not has_ragged) and (not has_pad_steps):
        # Common case: every block is full and in range -> no masking at all.
        body(masked=False)
    else:
        fast_upper = (total_blocks - 1) if has_ragged else total_blocks

        @pl.when(blk < fast_upper)
        def _fast():
            body(masked=False)

        if has_ragged:
            @pl.when(blk == total_blocks - 1)
            def _ragged_tail():
                body(masked=True)
        # blk >= total_blocks (padded duplicate steps): skipped entirely.

    @pl.when(i == pl.num_programs(1) - 1)
    def _finalize():
        o_ref[...] = jnp.sum(acc_ref[...]).reshape(1, 1, 1)


def _detected_num_segments():
    # v7x exposes 2 TensorCores per chip (grid "parallel" axes shard across
    # them); v5e/v6e are single-TC, so a single segment avoids any extra work.
    try:
        kind = jax.devices()[0].device_kind.lower()
    except Exception:
        return 1
    return 2 if "v7" in kind else 1


def log_cosh_loss(x, t, *, block_rows=4096, num_segments=None):
    assert x.shape == t.shape, "input and target must have the same shape"
    n = x.size
    assert n > 0

    fx = x.reshape(-1)
    ft = t.reshape(-1)

    # Ragged (<128-element) tail: fold in with a tiny plain-JAX expression
    # instead of padding/copying the whole arrays.
    rem = n % LANE
    n_main = n - rem
    tail_sum = jnp.float32(0.0)
    if rem:
        tx = fx[n_main:].astype(jnp.float32)
        tt = ft[n_main:].astype(jnp.float32)
        td = jnp.maximum(tx - tt, -20.0)
        tail_sum = jnp.sum(td * (jnp.log(1.0 + jnp.exp(-2.0 * td)) - _LN2))
        fx = fx[:n_main]
        ft = ft[:n_main]

    if n_main == 0:
        # Entire input is smaller than one 128-lane row: nothing to stream.
        return tail_sum / jnp.float32(n)

    rows = n_main // LANE
    x2 = fx.reshape(rows, LANE)
    t2 = ft.reshape(rows, LANE)

    # Row alignment: sublane packing per dtype (f32: 8, bf16/f16: 16, int8: 32).
    row_align = SUBLANE * max(1, 4 // x.dtype.itemsize, 4 // t.dtype.itemsize)

    block_rows = max(row_align, (int(block_rows) // row_align) * row_align)
    if rows <= block_rows:
        block_rows = _round_up(rows, row_align)
    if block_rows > _CHUNK_ROWS:
        block_rows = _round_up(block_rows, _CHUNK_ROWS)
        chunk_rows = _CHUNK_ROWS
    else:
        chunk_rows = block_rows

    if chunk_rows % _ACC_ROWS_MAX == 0:
        acc_rows = _ACC_ROWS_MAX
    elif chunk_rows <= _ACC_ROWS_MAX:
        acc_rows = chunk_rows
    else:
        acc_rows = row_align

    total_blocks = (rows + block_rows - 1) // block_rows
    if num_segments is None:
        num_segments = _detected_num_segments()
    num_segments = max(1, min(int(num_segments), total_blocks))
    steps = (total_blocks + num_segments - 1) // num_segments

    has_ragged = (rows % block_rows) != 0
    has_pad_steps = (num_segments * steps) != total_blocks

    if has_pad_steps:
        def in_map(s, i):
            return (jnp.minimum(s * steps + i, total_blocks - 1), 0)
    else:
        def in_map(s, i):
            return (s * steps + i, 0)

    kernel = functools.partial(
        _logcosh_kernel,
        rows=rows, block_rows=block_rows, chunk_rows=chunk_rows,
        acc_rows=acc_rows, steps=steps, total_blocks=total_blocks,
        has_ragged=has_ragged, has_pad_steps=has_pad_steps,
    )

    cost = pl.CostEstimate(
        flops=8 * n,
        transcendentals=2 * n,                     # exp + log per element
        bytes_accessed=n * (x.dtype.itemsize + t.dtype.itemsize)
                       + 4 * num_segments,
    )

    partial_sums = pl.pallas_call(
        kernel,
        out_shape=jax.ShapeDtypeStruct((num_segments, 1, 1), jnp.float32),
        grid_spec=pltpu.PrefetchScalarGridSpec(
            num_scalar_prefetch=0,
            grid=(num_segments, steps),
            in_specs=[
                pl.BlockSpec((block_rows, LANE), in_map),
                pl.BlockSpec((block_rows, LANE), in_map),
            ],
            out_specs=pl.BlockSpec((1, 1, 1), lambda s, i: (s, 0, 0)),
            scratch_shapes=[pltpu.VMEM((acc_rows, LANE), jnp.float32)],
        ),
        compiler_params=pltpu.CompilerParams(
            dimension_semantics=("parallel", "arbitrary"),
            vmem_limit_bytes=32 * 1024 * 1024,
        ),
        cost_estimate=cost,
    )(x2, t2)

    return (jnp.sum(partial_sums) + tail_sum) / jnp.float32(n)


def _reference(x, t):
    diff = x.astype(jnp.float32) - t.astype(jnp.float32)
    diff = jnp.maximum(diff, -20.0)
    return jnp.mean(diff * jnp.log((1.0 + jnp.exp(-2.0 * diff)) / 2.0))


if __name__ == "__main__":
    key = jax.random.PRNGKey(0)
    k1, k2 = jax.random.split(key)
    shape = (2, 4, 16, 16)  # NCHW, small
    x = jax.random.normal(k1, shape, dtype=jnp.float32)
    t = jax.random.normal(k2, shape, dtype=jnp.float32)

    loss = log_cosh_loss(x, t)
    loss = jax.block_until_ready(loss)

    ref = _reference(x, t)
    assert jnp.allclose(loss, ref, rtol=1e-5, atol=1e-6), (loss, ref)
    print("KERNEL_OK")
</pallas_src>

<mosaic_0001>
module attributes {stable_mosaic.version = 11 : i64} {
  func.func @_logcosh_kernel(%arg0: i32, %arg1: i32, %arg2: memref<16x128xf32, #tpu.memory_space<vmem>>, %arg3: memref<16x128xf32, #tpu.memory_space<vmem>>, %arg4: memref<1x1x1xf32, #tpu.memory_space<vmem>>, %arg5: memref<16x128xf32, #tpu.memory_space<vmem>>) attributes {dimension_semantics = [#tpu.dimension_semantics<parallel>, #tpu.dimension_semantics<arbitrary>], iteration_bounds = array<i64: 1, 1>, scalar_prefetch = 0 : i64, scratch_operands = 1 : i64, tpu.core_type = #tpu.core_type<tc>, window_params = [{transform_indices = @transform_0, window_bounds = array<i64: 16, 128>}, {transform_indices = @transform_1, window_bounds = array<i64: 16, 128>}, {transform_indices = @transform_2, window_bounds = array<i64: 1, 1, 1>}]} {
    %c0_i32 = arith.constant 0 : i32
    %0 = arith.cmpi eq, %arg1, %c0_i32 : i32
    %1 = arith.extui %0 : i1 to i32
    %c0_i32_0 = arith.constant 0 : i32
    %2 = arith.cmpi ne, %1, %c0_i32_0 : i32
    scf.if %2 {
      %cst_14 = arith.constant 0.000000e+00 : f32
      %25 = vector.broadcast %cst_14 : f32 to vector<16x128xf32>
      %c0_15 = arith.constant 0 : index
      %c0_16 = arith.constant 0 : index
      %26 = vector.load %arg5[%c0_15, %c0_16] : memref<16x128xf32, #tpu.memory_space<vmem>>, vector<16x128xf32>
      tpu.vector_store %arg5[%c0_15, %c0_16], %25 {strides = array<i32>} : memref<16x128xf32, #tpu.memory_space<vmem>>, vector<16x128xf32>,
    } else {
    }
    %c0 = arith.constant 0 : index
    %c0_1 = arith.constant 0 : index
    %3 = vector.load %arg2[%c0, %c0_1] : memref<16x128xf32, #tpu.memory_space<vmem>>, vector<16x128xf32>
    %c0_2 = arith.constant 0 : index
    %c0_3 = arith.constant 0 : index
    %4 = vector.load %arg3[%c0_2, %c0_3] : memref<16x128xf32, #tpu.memory_space<vmem>>, vector<16x128xf32>
    %5 = arith.subf %3, %4 : vector<16x128xf32>
    %cst = arith.constant -2.000000e+01 : f32
    %6 = vector.broadcast %cst : f32 to vector<16x128xf32>
    %7 = arith.maximumf %5, %6 : vector<16x128xf32>
    %cst_4 = arith.constant -2.000000e+00 : f32
    %8 = vector.broadcast %cst_4 : f32 to vector<16x128xf32>
    %9 = arith.mulf %8, %7 : vector<16x128xf32>
    %10 = math.exp %9 : vector<16x128xf32>
    %cst_5 = arith.constant 1.000000e+00 : f32
    %11 = vector.broadcast %cst_5 : f32 to vector<16x128xf32>
    %12 = arith.addf %11, %10 : vector<16x128xf32>
    %13 = math.log %12 : vector<16x128xf32>
    %cst_6 = arith.constant 0.693147182 : f32
    %14 = vector.broadcast %cst_6 : f32 to vector<16x128xf32>
    %15 = arith.subf %13, %14 : vector<16x128xf32>
    %16 = arith.mulf %7, %15 : vector<16x128xf32>
    %c0_7 = arith.constant 0 : index
    %c0_8 = arith.constant 0 : index
    %17 = vector.load %arg5[%c0_7, %c0_8] : memref<16x128xf32, #tpu.memory_space<vmem>>, vector<16x128xf32>
    %18 = vector.shape_cast %16 : vector<16x128xf32> to vector<1x16x128xf32>
    %cst_9 = arith.constant dense<0.000000e+00> : vector<16x128xf32>
    %19 = vector.multi_reduction <add>, %18, %cst_9 [0] : vector<1x16x128xf32> to vector<16x128xf32>
    %20 = arith.addf %17, %19 : vector<16x128xf32>
    %c0_10 = arith.constant 0 : index
    %c0_11 = arith.constant 0 : index
    %21 = vector.load %arg5[%c0_10, %c0_11] : memref<16x128xf32, #tpu.memory_space<vmem>>, vector<16x128xf32>
    tpu.vector_store %arg5[%c0_10, %c0_11], %20 {strides = array<i32>} : memref<16x128xf32, #tpu.memory_space<vmem>>, vector<16x128xf32>,
    %c0_i32_12 = arith.constant 0 : i32
    %22 = arith.cmpi eq, %arg1, %c0_i32_12 : i32
    %23 = arith.extui %22 : i1 to i32
    %c0_i32_13 = arith.constant 0 : i32
    %24 = arith.cmpi ne, %23, %c0_i32_13 : i32
    scf.if %24 {
      %c0_14 = arith.constant 0 : index
      %c0_15 = arith.constant 0 : index
      %25 = vector.load %arg5[%c0_14, %c0_15] : memref<16x128xf32, #tpu.memory_space<vmem>>, vector<16x128xf32>
      %26 = vector.shape_cast %25 : vector<16x128xf32> to vector<1x16x128xf32>
      %cst_16 = arith.constant dense<0.000000e+00> : vector<1xf32>
      %27 = vector.multi_reduction <add>, %26, %cst_16 [1, 2] : vector<1x16x128xf32> to vector<1xf32>
      %28 = vector.shape_cast %27 : vector<1xf32> to vector<1x1x1xf32>
      %29 = vector.extract %28[0, 0, 0] : f32 from vector<1x1x1xf32>
      %30 = vector.broadcast %29 : f32 to vector<1x1x1xf32>
      %c0_17 = arith.constant 0 : index
      %c0_18 = arith.constant 0 : index
      %c0_19 = arith.constant 0 : index
      %31 = vector.load %arg4[%c0_17, %c0_18, %c0_19] : memref<1x1x1xf32, #tpu.memory_space<vmem>>, vector<1x1x1xf32>
      tpu.vector_store %arg4[%c0_17, %c0_18, %c0_19], %30 {strides = array<i32>} : memref<1x1x1xf32, #tpu.memory_space<vmem>>, vector<1x1x1xf32>,
    } else {
    }
    return
  }
  func.func @transform_0(%arg0: i32, %arg1: i32) -> (i32, i32) {
    %c1_i32 = arith.constant 1 : i32
    %0 = arith.muli %arg0, %c1_i32 : i32
    %1 = arith.addi %0, %arg1 : i32
    %c0_i32 = arith.constant 0 : i32
    %c0_i32_0 = arith.constant 0 : i32
    return %1, %c0_i32 : i32, i32
  }
  func.func @transform_1(%arg0: i32, %arg1: i32) -> (i32, i32) {
    %c1_i32 = arith.constant 1 : i32
    %0 = arith.muli %arg0, %c1_i32 : i32
    %1 = arith.addi %0, %arg1 : i32
    %c0_i32 = arith.constant 0 : i32
    %c0_i32_0 = arith.constant 0 : i32
    return %1, %c0_i32 : i32, i32
  }
  func.func @transform_2(%arg0: i32, %arg1: i32) -> (i32, i32, i32) {
    %c0_i32 = arith.constant 0 : i32
    %c0_i32_0 = arith.constant 0 : i32
    %c0_i32_1 = arith.constant 0 : i32
    return %arg0, %c0_i32, %c0_i32_0 : i32, i32, i32
  }
}

</mosaic_0001>

<llo_original>
// kernel: tpu_custom_call.1
$region0: #{tpu_custom_call.1}
  #allocation0 [shape = 'u32[]', space=smem, size = 0x4, offset = 0x4, fixed_abs, tag = 'smem constant byte address 0x4 - core index']
  #allocation1 [shape = 'u32[72,128]{1,0:T(1,128)}', space=vmem, size = 0x9000, scoped, tag = 'internal scratch']
  #allocation2 [shape = 'f32[16,128]{1,0:T(8,128)}', space=vmem, size = 0x2000, scoped, tag = 'scratch operand']
  %s0 = inlined_call_operand.hbm [shape: f32[16,128], index: 0, kind: input, shape index: {}]
  %s1 = inlined_call_operand.hbm [shape: f32[16,128], index: 1, kind: input, shape index: {}]
  %s2 = inlined_call_operand.hbm [shape: f32[1,1,1], index: 2, kind: output, shape index: {}]
  %s3 = sld [smem:[#allocation0]]
  $region34: #{tpu_custom_call.1} parent=0
    _
  %s5 = ssub.s32 1, %s3
  %s6 = scalar_select 0, %s5, %s3
  $region1: #{tpu_custom_call.1} parent=0
    #allocation3 [shape = 'u8[8192]{0}', space=vmem, size = 0x2000, scoped, tag = 'input window, operand 0, single buffered']
    #allocation4 [shape = 's32[1]{0}', space=sflag, size = 0x4, scoped, tag = 'scoped memory for tpu_custom_call.1']
    #allocation5 [shape = 's32[1]{0}', space=sflag, size = 0x4, scoped, tag = 'scoped memory for tpu_custom_call.1']
    #allocation6 [shape = 'u8[8192]{0}', space=vmem, size = 0x2000, scoped, tag = 'input window, operand 1, single buffered']
    #allocation7 [shape = 's32[1]{0}', space=sflag, size = 0x4, scoped, tag = 'scoped memory for tpu_custom_call.1']
    #allocation8 [shape = 'u8[512]{0}', space=vmem, size = 0x400, scoped, tag = 'output window, operand 0, single buffered']
    %7 = vsyncpa [#allocation4], 0
    %8 = vsyncpa [#allocation7], 0
    %9 = vsyncpa [#allocation5], 0
    // Predicated region
    $region2: #{tpu_custom_call.1} parent=1 // pred_check
      _
    $region3: #{tpu_custom_call.1} parent=1 // pred_check_branch
      %11 = sbr.rel (0) target = $region5
    $region4: #{tpu_custom_call.1} parent=1 // pred_region
      %s12 = sadd.s32 0, 0
      %s13 = smul.u32 2, %s12
      %15 = vsyncadd [#allocation4], 0
      %s16 = smul.addr %s13, 8
      %s17 = scalar_lea.hbm %s0, %s16
      %s18 = sshll.u32 %s17, 4
      %s19 = int_to_ptr.hbm [resolvable:$true] %s18
      %s20 = sshll.u32 [#allocation3], 4
      %s21 = int_to_ptr.vmem [resolvable:$true] %s20
      %26 = dma.hbm_to_vmem [thread:$0]  %s19, 256, %s21, [#allocation4], 128, 128, 8
    $region5: #{tpu_custom_call.1} parent=1 // pred_fallthru
      _
    // Predicated region
    $region6: #{tpu_custom_call.1} parent=1 // pred_check
      _
    $region7: #{tpu_custom_call.1} parent=1 // pred_check_branch
      %28 = sbr.rel (0) target = $region9
    $region8: #{tpu_custom_call.1} parent=1 // pred_region
      %s29 = sadd.s32 0, 0
      %s30 = smul.u32 2, %s29
      %32 = vsyncadd [#allocation7], 0
      %s33 = smul.addr %s30, 8
      %s34 = scalar_lea.hbm %s1, %s33
      %s35 = sshll.u32 %s34, 4
      %s36 = int_to_ptr.hbm [resolvable:$true] %s35
      %s37 = sshll.u32 [#allocation6], 4
      %s38 = int_to_ptr.vmem [resolvable:$true] %s37
      %43 = dma.hbm_to_vmem [thread:$0]  %s36, 256, %s38, [#allocation7], 128, 128, 8
    $region9: #{tpu_custom_call.1} parent=1 // pred_fallthru
      _
    // Predicated region
    $region10: #{tpu_custom_call.1} parent=1 // pred_check
      _
    $region11: #{tpu_custom_call.1} parent=1 // pred_check_branch
      %45 = sbr.rel (0) target = $region13
    $region12: #{tpu_custom_call.1} parent=1 // pred_region
      %47 = dma.done [#allocation4], 256
    $region13: #{tpu_custom_call.1} parent=1 // pred_fallthru
      _
    // Predicated region
    $region14: #{tpu_custom_call.1} parent=1 // pred_check
      _
    $region15: #{tpu_custom_call.1} parent=1 // pred_check_branch
      %49 = sbr.rel (0) target = $region17
    $region16: #{tpu_custom_call.1} parent=1 // pred_region
      %51 = dma.done [#allocation7], 256
    $region17: #{tpu_custom_call.1} parent=1 // pred_fallthru
      _
    %s52 = sadd.s32 0, 0
    %s53 = smul.u32 2, %s52
    %s54 = sadd.s32 0, 0
    %s55 = smul.u32 2, %s54
    %p56 = scmp.eq.s32.totalorder 0, 0
    // Predicated region
    $region18: #{tpu_custom_call.1} parent=1 // pred_check
      %p57 = pneg %p56
    $region19: #{tpu_custom_call.1} parent=1 // pred_check_branch
      %59 = sbr.rel (%p57) target = $region21
    $region20: #{tpu_custom_call.1} parent=1 // pred_region
      %60 = vst [vmem:[#allocation2] sm:$0xff] 0.0
      %61 = vst [vmem:[#allocation2 + $0x8] sm:$0xff] 0.0
    $region21: #{tpu_custom_call.1} parent=1 // pred_fallthru
      _
    %v62 = vld [vmem:[#allocation3] sm:$0xff]
    %v63 = vld [vmem:[#allocation3 + $0x8] sm:$0xff]
    %v64 = vld [vmem:[#allocation6] sm:$0xff]
    %v65 = vld [vmem:[#allocation6 + $0x8] sm:$0xff]
    %v66 = vsub.f32 %v62, %v64
    %v67 = vsub.f32 %v63, %v65
    %v68 = vmax.f32 %v66, -20.0
    %v69 = vmax.f32 %v67, -20.0
    %v70 = vmul.f32 %v68, -2.0
    %v71 = vmul.f32 %v69, -2.0
    %v72 = vmul.f32 %v70, 1.442695
    %v73 = vpow.pop %v72
    %v74 = vmul.f32 %v71, 1.442695
    %v75 = vpow.pop %v74
    %v76 = vadd.f32 %v73, 1.0
    %v77 = vadd.f32 %v75, 1.0
    %v78 = vlog2.pop %v76
    %v79 = vmul.f32 %v78, 0.6931472
    %v80 = vlog2.pop %v77
    %v81 = vmul.f32 %v80, 0.6931472
    %v82 = vsub.f32 %v79, 0.6931472
    %v83 = vsub.f32 %v81, 0.6931472
    %v84 = vmul.f32 %v68, %v82
    %v85 = vmul.f32 %v69, %v83
    %v86 = vld [vmem:[#allocation2] sm:$0xff]
    %v87 = vld [vmem:[#allocation2 + $0x8] sm:$0xff]
    %v88 = vadd.f32 %v84, 0.0
    %v89 = vadd.f32 %v85, 0.0
    %v90 = vadd.f32 %v86, %v88
    %v91 = vadd.f32 %v87, %v89
    %92 = vst [vmem:[#allocation2] sm:$0xff] %v90
    %93 = vst [vmem:[#allocation2 + $0x8] sm:$0xff] %v91
    // Predicated region
    $region22: #{tpu_custom_call.1} parent=1 // pred_check
      %p94 = pneg %p56
    $region23: #{tpu_custom_call.1} parent=1 // pred_check_branch
      %96 = sbr.rel (%p94) target = $region25
    $region24: #{tpu_custom_call.1} parent=1 // pred_region
      %v97 = vld [vmem:[#allocation2] sm:$0xff]
      %v98 = vld [vmem:[#allocation2 + $0x8] sm:$0xff]
      %v99 = vadd.f32 %v97, %v98
      %100 = vadd.xlane.f32.xlu0 %v99
      %v101 = vpop.xlane.xlu0 %100
      %v102 = vrot.slane %v101, 4
      %v103 = vadd.f32 %v101, %v102
      %v104 = vrot.slane %v103, 2
      %v105 = vadd.f32 %v103, %v104
      %v106 = vrot.slane %v105, 1
      %v107 = vadd.f32 %v105, %v106
      %s108 = vtos %v107
      %v109 = vstv %s108
      %vm110 = vcmask 0
      %111 = vst.msk [vmem:[#allocation8] sm:$0x1] %vm110, %v109
    $region25: #{tpu_custom_call.1} parent=1 // pred_fallthru
      _
    // Predicated region
    $region26: #{tpu_custom_call.1} parent=1 // pred_check
      _
    $region27: #{tpu_custom_call.1} parent=1 // pred_check_branch
      %113 = sbr.rel (0) target = $region29
    $region28: #{tpu_custom_call.1} parent=1 // pred_region
      %115 = vsyncadd [#allocation5], 0
      %s117 = sshll.u32 [#allocation8], 4
      %s118 = int_to_ptr.vmem [resolvable:$true] %s117
      %s119 = sshll.u32 %s2, 4
      %s120 = int_to_ptr.hbm [resolvable:$true] %s119
      %122 = dma.vmem_to_hbm [thread:$0]  %s118, 16, %s120, [#allocation5]
    $region29: #{tpu_custom_call.1} parent=1 // pred_fallthru
      _
    // Predicated region
    $region30: #{tpu_custom_call.1} parent=1 // pred_check
      _
    $region31: #{tpu_custom_call.1} parent=1 // pred_check_branch
      %124 = sbr.rel (0) target = $region33
    $region32: #{tpu_custom_call.1} parent=1 // pred_region
      %126 = dma.done [#allocation5], 16
    $region33: #{tpu_custom_call.1} parent=1 // pred_fallthru
      _
    %127 = vsyncpa [#allocation4], 1
    %128 = vsyncpa [#allocation7], 1
    %129 = vsyncpa [#allocation5], 1

</llo_original>
